<compile_context>
chip_gen: v7x
topology: tpu7x:2x2x1
jax: 0.10.0
libtpu: 0.0.40
codegen_flags: <defaults>
</compile_context>

<pallas_src>
from functools import partial

import jax
import jax.numpy as jnp
from jax.experimental import pallas as pl
from jax.experimental.pallas import tpu as pltpu


def _rollout_kernel(dt_ref, x0_ref, k_ref, out_ref):
    """Whole forward pass in one kernel invocation (no grid).

    dt_ref  : SMEM (1,)  f32       -- step size (runtime scalar)
    x0_ref  : VMEM (B, D)          -- learnable initial state (estimate_init)
    k_ref   : VMEM (D, D)          -- Koopman operator K
    out_ref : VMEM (B, (nb+1)*D)   -- lane-dense trajectory slab [x0|x1|...|x_nb]
    """
    D = k_ref.shape[0]
    nb = out_ref.shape[1] // D - 1  # static Python int at trace time

    # A = dt * K  (scalar broadcast on the VPU).
    A = dt_ref[0] * k_ref[...]

    # Identity via 2-D iota (1-D iota is not supported on TPU).
    row = jax.lax.broadcasted_iota(jnp.int32, (D, D), 0)
    col = jax.lax.broadcasted_iota(jnp.int32, (D, D), 1)
    eye = jnp.where(row == col, 1.0, 0.0).astype(jnp.float32)

    # One RK4 step of the linear autonomous system dx/dt = x @ K is exactly
    #   x_{t+1} = x_t @ M,   M = I + A + A^2/2 + A^3/6 + A^4/24.
    # Horner form -> 3 in-kernel MXU dots (review #1: no wrapper dots, no HBM
    # round trip for M).
    M = eye + 0.25 * A
    M = eye + jnp.dot((1.0 / 3.0) * A, M, preferred_element_type=jnp.float32)
    M = eye + jnp.dot(0.5 * A, M, preferred_element_type=jnp.float32)
    M = eye + jnp.dot(A, M, preferred_element_type=jnp.float32)

    # Concatenated powers [M^1 | ... | M^nb] by doubling (review #2):
    # log2(nb) dots instead of an nb-deep chain of tiny (B,D)@(D,D) matmuls.
    if nb == 0:
        mcat = eye
    else:
        cat = M  # [M^1 | ... | M^k], shape (D, k*D); trace-time Python loop.
        k = 1
        while k < nb:
            n_new = min(k, nb - k)
            p_k = cat[:, (k - 1) * D:k * D]                    # M^k
            lows = cat if n_new == k else cat[:, :n_new * D]   # [M^1..M^n_new]
            news = jnp.dot(p_k, lows, preferred_element_type=jnp.float32)
            cat = jnp.concatenate([cat, news], axis=1)         # [M^1..M^(k+n_new)]
            k += n_new
        mcat = jnp.concatenate([eye, cat], axis=1)             # [I | M^1 | ... | M^nb]

    # Whole rollout as ONE lane-dense matmul (B, D) @ (D, (nb+1)*D) and a
    # single dense store (review #3: no per-step masked (B, D) writes).
    out_ref[...] = jnp.dot(x0_ref[...], mcat, preferred_element_type=jnp.float32)


@partial(jax.jit, static_argnums=(3,))  # only nb is static (fixes output shape)
def multi_rinn_forward(estimate_init, K, t0, nb, dt):
    """Multi_RINN forward: RK4 rollout of dx/dt = x @ K. Returns (nb+1, B, D)."""
    del t0  # autonomous dynamics: t0 never enters the update (traced, so new
            # t0 values do not trigger recompilation)
    B, D = estimate_init.shape
    dt_arr = jnp.asarray(dt, dtype=jnp.float32).reshape((1,))  # runtime scalar -> SMEM

    slab = pl.pallas_call(
        _rollout_kernel,
        out_shape=jax.ShapeDtypeStruct((B, (nb + 1) * D), jnp.float32),
        in_specs=[
            pl.BlockSpec(memory_space=pltpu.MemorySpace.SMEM),  # dt scalar
            pl.BlockSpec(memory_space=pltpu.MemorySpace.VMEM),  # estimate_init
            pl.BlockSpec(memory_space=pltpu.MemorySpace.VMEM),  # K
        ],
        out_specs=pl.BlockSpec(memory_space=pltpu.MemorySpace.VMEM),
    )(dt_arr, estimate_init.astype(jnp.float32), K.astype(jnp.float32))

    # Layout plumbing only: lane-dense slab -> (nb+1, B, D) trajectory.
    return jnp.transpose(slab.reshape(B, nb + 1, D), (1, 0, 2))


def _reference_forward(estimate_init, K, t0, nb, dt):
    """Pure-JAX reference: explicit per-step RK4 rollout (as in the torch model)."""
    del t0
    x = estimate_init.astype(jnp.float32)
    K = K.astype(jnp.float32)
    traj = [x]
    for _ in range(nb):
        k1 = x @ K
        k2 = (x + 0.5 * dt * k1) @ K
        k3 = (x + 0.5 * dt * k2) @ K
        k4 = (x + dt * k3) @ K
        x = x + (dt / 6.0) * (k1 + 2.0 * k2 + 2.0 * k3 + k4)
        traj.append(x)
    return jnp.stack(traj, axis=0)


class GetInitPallas:
    """JAX/Pallas counterpart of torch `get_init`."""

    def __init__(self, koopman_operator, inp_init):
        # estimate_init is the module's learnable parameter (deterministic init here)
        self.estimate_init = jnp.asarray(inp_init, dtype=jnp.float32)
        self.K = jnp.asarray(koopman_operator, dtype=jnp.float32)

    def __call__(self, t0, nb, dt):
        return multi_rinn_forward(self.estimate_init, self.K, t0, nb, dt)


if __name__ == "__main__":
    # Small, deterministic setup: batch=2, augmented state dim (hidden)=32.
    B, D = 2, 32
    nb, dt, t0 = 8, 0.1, 0.0

    key = jax.random.PRNGKey(0)
    k_init, k_op = jax.random.split(key)
    inp_init = jax.random.normal(k_init, (B, D), dtype=jnp.float32)
    # Mildly contractive Koopman operator so the rollout stays well-conditioned.
    koopman = 0.1 * jax.random.normal(k_op, (D, D), dtype=jnp.float32)
    koopman = koopman - 0.05 * jnp.eye(D, dtype=jnp.float32)

    model = GetInitPallas(koopman, inp_init)

    pred = model(t0, nb, dt)
    pred = jax.block_until_ready(pred)

    ref = _reference_forward(inp_init, koopman, t0, nb, dt)
    assert pred.shape == (nb + 1, B, D)
    # Propagator / power-doubling form reassociates the RK4 arithmetic ->
    # tolerance-based check against the step-by-step reference.
    assert jnp.allclose(pred, ref, atol=1e-4, rtol=1e-4)

    print("KERNEL_OK")
</pallas_src>

<mosaic_0001>
module attributes {stable_mosaic.version = 11 : i64} {
  func.func @_rollout_kernel(%arg0: memref<1xf32, #tpu.memory_space<smem>>, %arg1: memref<2x32xf32, #tpu.memory_space<vmem>>, %arg2: memref<32x32xf32, #tpu.memory_space<vmem>>, %arg3: memref<2x288xf32, #tpu.memory_space<vmem>>) attributes {dimension_semantics = [], scalar_prefetch = 0 : i64, scratch_operands = 0 : i64, tpu.core_type = #tpu.core_type<tc>} {
    %c0 = arith.constant 0 : index
    %0 = memref.load %arg0[%c0] : memref<1xf32, #tpu.memory_space<smem>>
    %c0_0 = arith.constant 0 : index
    %c0_1 = arith.constant 0 : index
    %1 = vector.load %arg2[%c0_0, %c0_1] : memref<32x32xf32, #tpu.memory_space<vmem>>, vector<32x32xf32>
    %2 = vector.broadcast %0 : f32 to vector<32x32xf32>
    %3 = arith.mulf %2, %1 : vector<32x32xf32>
    %4 = tpu.iota {dimensions = array<i32: 0>} : vector<32x32xi32>
    %5 = tpu.iota {dimensions = array<i32: 1>} : vector<32x32xi32>
    %6 = arith.cmpi eq, %4, %5 : vector<32x32xi32>
    %cst = arith.constant 1.000000e+00 : f32
    %cst_2 = arith.constant 0.000000e+00 : f32
    %7 = vector.broadcast %cst : f32 to vector<32x32xf32>
    %8 = vector.broadcast %cst_2 : f32 to vector<32x32xf32>
    %9 = arith.select %6, %7, %8 : vector<32x32xi1>, vector<32x32xf32>
    %cst_3 = arith.constant 2.500000e-01 : f32
    %10 = vector.broadcast %cst_3 : f32 to vector<32x32xf32>
    %11 = arith.mulf %10, %3 : vector<32x32xf32>
    %12 = arith.addf %9, %11 : vector<32x32xf32>
    %cst_4 = arith.constant 0.333333343 : f32
    %13 = vector.broadcast %cst_4 : f32 to vector<32x32xf32>
    %14 = arith.mulf %13, %3 : vector<32x32xf32>
    %cst_5 = arith.constant dense<0.000000e+00> : vector<32x32xf32>
    %15 = tpu.matmul %14, %12, %cst_5 {dimension_numbers = #tpu.dot_dimension_numbers<[1], [0], [0], [1], [0, 0, 1, 1], [], []>} : vector<32x32xf32>, vector<32x32xf32>, vector<32x32xf32> -> vector<32x32xf32>
    %16 = arith.addf %9, %15 : vector<32x32xf32>
    %cst_6 = arith.constant 5.000000e-01 : f32
    %17 = vector.broadcast %cst_6 : f32 to vector<32x32xf32>
    %18 = arith.mulf %17, %3 : vector<32x32xf32>
    %cst_7 = arith.constant dense<0.000000e+00> : vector<32x32xf32>
    %19 = tpu.matmul %18, %16, %cst_7 {dimension_numbers = #tpu.dot_dimension_numbers<[1], [0], [0], [1], [0, 0, 1, 1], [], []>} : vector<32x32xf32>, vector<32x32xf32>, vector<32x32xf32> -> vector<32x32xf32>
    %20 = arith.addf %9, %19 : vector<32x32xf32>
    %cst_8 = arith.constant dense<0.000000e+00> : vector<32x32xf32>
    %21 = tpu.matmul %3, %20, %cst_8 {dimension_numbers = #tpu.dot_dimension_numbers<[1], [0], [0], [1], [0, 0, 1, 1], [], []>} : vector<32x32xf32>, vector<32x32xf32>, vector<32x32xf32> -> vector<32x32xf32>
    %22 = arith.addf %9, %21 : vector<32x32xf32>
    %cst_9 = arith.constant dense<0.000000e+00> : vector<32x32xf32>
    %23 = tpu.matmul %22, %22, %cst_9 {dimension_numbers = #tpu.dot_dimension_numbers<[1], [0], [0], [1], [0, 0, 1, 1], [], []>} : vector<32x32xf32>, vector<32x32xf32>, vector<32x32xf32> -> vector<32x32xf32>
    %24 = tpu.concatenate %22, %23 in 1 : vector<32x32xf32>, vector<32x32xf32> -> vector<32x64xf32>
    %25 = vector.extract_strided_slice %24 {offsets = [0, 32], sizes = [32, 32], strides = [1, 1]} : vector<32x64xf32> to vector<32x32xf32>
    %cst_10 = arith.constant dense<0.000000e+00> : vector<32x64xf32>
    %26 = tpu.matmul %25, %24, %cst_10 {dimension_numbers = #tpu.dot_dimension_numbers<[1], [0], [0], [1], [0, 0, 1, 1], [], []>} : vector<32x32xf32>, vector<32x64xf32>, vector<32x64xf32> -> vector<32x64xf32>
    %27 = tpu.concatenate %24, %26 in 1 : vector<32x64xf32>, vector<32x64xf32> -> vector<32x128xf32>
    %28 = vector.extract_strided_slice %27 {offsets = [0, 96], sizes = [32, 32], strides = [1, 1]} : vector<32x128xf32> to vector<32x32xf32>
    %cst_11 = arith.constant dense<0.000000e+00> : vector<32x128xf32>
    %29 = tpu.matmul %28, %27, %cst_11 {dimension_numbers = #tpu.dot_dimension_numbers<[1], [0], [0], [1], [0, 0, 1, 1], [], []>} : vector<32x32xf32>, vector<32x128xf32>, vector<32x128xf32> -> vector<32x128xf32>
    %30 = tpu.concatenate %27, %29 in 1 : vector<32x128xf32>, vector<32x128xf32> -> vector<32x256xf32>
    %31 = tpu.concatenate %9, %30 in 1 : vector<32x32xf32>, vector<32x256xf32> -> vector<32x288xf32>
    %c0_12 = arith.constant 0 : index
    %c0_13 = arith.constant 0 : index
    %32 = vector.load %arg1[%c0_12, %c0_13] : memref<2x32xf32, #tpu.memory_space<vmem>>, vector<2x32xf32>
    %cst_14 = arith.constant dense<0.000000e+00> : vector<2x288xf32>
    %33 = tpu.matmul %32, %31, %cst_14 {dimension_numbers = #tpu.dot_dimension_numbers<[1], [0], [0], [1], [0, 0, 1, 1], [], []>} : vector<2x32xf32>, vector<32x288xf32>, vector<2x288xf32> -> vector<2x288xf32>
    %c0_15 = arith.constant 0 : index
    %c0_16 = arith.constant 0 : index
    %34 = vector.load %arg3[%c0_15, %c0_16] : memref<2x288xf32, #tpu.memory_space<vmem>>, vector<2x288xf32>
    tpu.vector_store %arg3[%c0_15, %c0_16], %33 {strides = array<i32>} : memref<2x288xf32, #tpu.memory_space<vmem>>, vector<2x288xf32>,
    return
  }
}

</mosaic_0001>

<llo_original>
// kernel: multi_rinn_forward.1
$region0: #{multi_rinn_forward.1}
  #allocation0 [shape = 'u32[]', space=smem, size = 0x4, offset = 0x4, fixed_abs, tag = 'smem constant byte address 0x4 - core index']
  #allocation1 [shape = 'u32[144,128]{1,0:T(1,128)}', space=vmem, size = 0x12000, scoped, tag = 'internal scratch']
  #allocation2 [shape = 'f32[1]{0:T(128)S(6)}', space=smem, size = 0x200, scoped, tag = 'scoped memory for multi_rinn_forward.1']
  %s0 = inlined_call_operand.<no memory space> [shape: f32[1], index: 0, kind: input, shape index: {}]
  %s1 = inlined_call_operand.vmem [shape: f32[2,32], index: 1, kind: input, shape index: {}]
  %s2 = inlined_call_operand.hbm [shape: f32[32,32], index: 2, kind: input, shape index: {}]
  %s3 = inlined_call_operand.vmem [shape: f32[2,288], index: 3, kind: output, shape index: {}]
  %s4 = sld [smem:[#allocation0]]
  $region26: #{multi_rinn_forward.1} parent=0
    _
  %s6 = ssub.s32 1, %s4
  %s7 = scalar_select 0, %s6, %s4
  %8 = sst [smem:[#allocation2]] %s0
  $region1: #{multi_rinn_forward.1} parent=0
    #allocation3 [shape = 'u8[16384]{0}', space=vmem, size = 0x4000, scoped, tag = 'input window, operand 2, single buffered']
    #allocation4 [shape = 's32[1]{0}', space=sflag, size = 0x4, scoped, tag = 'scoped memory for multi_rinn_forward.1']
    %9 = vsyncpa [#allocation4], 0
    // Predicated region
    $region2: #{multi_rinn_forward.1} parent=1 // pred_check
      _
    $region3: #{multi_rinn_forward.1} parent=1 // pred_check_branch
      %11 = sbr.rel (0) target = $region5
    $region4: #{multi_rinn_forward.1} parent=1 // pred_region
      _
    $region5: #{multi_rinn_forward.1} parent=1 // pred_fallthru
      _
    // Predicated region
    $region6: #{multi_rinn_forward.1} parent=1 // pred_check
      _
    $region7: #{multi_rinn_forward.1} parent=1 // pred_check_branch
      %13 = sbr.rel (0) target = $region9
    $region8: #{multi_rinn_forward.1} parent=1 // pred_region
      _
    $region9: #{multi_rinn_forward.1} parent=1 // pred_fallthru
      _
    // Predicated region
    $region10: #{multi_rinn_forward.1} parent=1 // pred_check
      _
    $region11: #{multi_rinn_forward.1} parent=1 // pred_check_branch
      %15 = sbr.rel (0) target = $region13
    $region12: #{multi_rinn_forward.1} parent=1 // pred_region
      %s17 = ssub.s32 512, 512
      %18 = vsyncadd [#allocation4], %s17
      %s19 = sshll.u32 [#allocation3], 4
      %s20 = int_to_ptr.vmem [resolvable:$true] %s19
      %25 = dma.hbm_to_vmem [thread:$0]  %s2, 512, %s20, [#allocation4], 128, 128, 8
    $region13: #{multi_rinn_forward.1} parent=1 // pred_fallthru
      _
    // Predicated region
    $region14: #{multi_rinn_forward.1} parent=1 // pred_check
      _
    $region15: #{multi_rinn_forward.1} parent=1 // pred_check_branch
      %27 = sbr.rel (0) target = $region17
    $region16: #{multi_rinn_forward.1} parent=1 // pred_region
      %28 = dma.done [#allocation4], 512
    $region17: #{multi_rinn_forward.1} parent=1 // pred_fallthru
      _
    %s29 = sld [smem:[#allocation2]]
    %v30 = vld [vmem:[#allocation3] sm:$0xff]
    %v31 = vld [vmem:[#allocation3 + $0x8] sm:$0xff]
    %v32 = vld [vmem:[#allocation3 + $0x10] sm:$0xff]
    %v33 = vld [vmem:[#allocation3 + $0x18] sm:$0xff]
    %v34 = vstv %s29
    %v35 = vmul.f32 %v34, %v30
    %v36 = vmul.f32 %v34, %v31
    %v37 = vmul.f32 %v34, %v32
    %v38 = vmul.f32 %v34, %v33
    %v39 = vlaneseq
    %v40 = vshrl.u32 %v39, 7
    %v41 = vadd.s32 %v40, 8
    %v42 = vadd.s32 %v40, 16
    %v43 = vadd.s32 %v40, 24
    %v44 = vlaneseq
    %v45 = vand.u32 %v44, 127
    %vm46 = vcmp.eq.s32.totalorder %v40, %v45
    %vm47 = vcmp.eq.s32.totalorder %v41, %v45
    %vm48 = vcmp.eq.s32.totalorder %v42, %v45
    %vm49 = vcmp.eq.s32.totalorder %v43, %v45
    %v50 = vsel %vm46, 1.0, 0.0
    %v51 = vsel %vm47, 1.0, 0.0
    %v52 = vsel %vm48, 1.0, 0.0
    %v53 = vsel %vm49, 1.0, 0.0
    %v54 = vmul.f32 %v35, 0.25
    %v55 = vmul.f32 %v36, 0.25
    %v56 = vmul.f32 %v37, 0.25
    %v57 = vmul.f32 %v38, 0.25
    %v58 = vadd.f32 %v50, %v54
    %v59 = vadd.f32 %v51, %v55
    %v60 = vadd.f32 %v52, %v56
    %v61 = vadd.f32 %v53, %v57
    %v62 = vmul.f32 %v35, 0.33333334
    %v63 = vmul.f32 %v36, 0.33333334
    %v64 = vmul.f32 %v37, 0.33333334
    %v65 = vmul.f32 %v38, 0.33333334
    %vm66 = vcmask 261120
    %v68 = vsel %vm66, %v62, 0
    %v71 = vsel %vm66, %v63, 0
    %v74 = vsel %vm66, %v64, 0
    %v77 = vsel %vm66, %v65, 0
    %79 = vmatprep.subr.mxu0 0.0
    %80 = vmatpush1.msra.mxu0 %v58
    %81 = vmatprep.subr.mxu0 0.0
    %82 = vmatpush1.msra.mxu0 %v59
    %83 = vmatprep.subr.mxu0 0.0
    %84 = vmatpush1.msra.mxu0 %v60
    %85 = vmatprep.subr.mxu0 0.0
    %86 = vmatpush1.msra.mxu0 %v61
    %87 = vmatprep.subr.mxu0 0.0
    %88 = vmatpush1.msra.mxu0 0.0
    %89 = vmatprep.subr.mxu0 0.0
    %90 = vmatpush1.msra.mxu0 0.0
    %91 = vmatprep.subr.mxu0 0.0
    %92 = vmatpush1.msra.mxu0 0.0
    %93 = vmatprep.subr.mxu0 0.0
    %94 = vmatpush1.msra.mxu0 0.0
    %95 = vmatprep.subr.mxu0 0.0
    %96 = vmatpush1.msra.mxu0 0.0
    %97 = vmatprep.subr.mxu0 0.0
    %98 = vmatpush1.msra.mxu0 0.0
    %99 = vmatprep.subr.mxu0 0.0
    %100 = vmatpush1.msra.mxu0 0.0
    %101 = vmatprep.subr.mxu0 0.0
    %102 = vmatpush1.msra.mxu0 0.0
    %103 = vmatprep.subr.mxu0 0.0
    %104 = vmatpush1.msra.mxu0 0.0
    %105 = vmatprep.subr.mxu0 0.0
    %106 = vmatpush1.msra.mxu0 0.0
    %107 = vmatprep.subr.mxu0 0.0
    %108 = vmatpush1.msra.mxu0 0.0
    %109 = vmatprep.subr.mxu0 0.0
    %110 = vmatpush1.msra.mxu0 0.0
    %111 = vmatprep.subr.mxu0 0.0
    %112 = vmatpush1.msra.mxu0 0.0
    %113 = vmatprep.subr.mxu0 0.0
    %114 = vmatpush1.msra.mxu0 0.0
    %115 = vmatprep.subr.mxu0 0.0
    %116 = vmatpush1.msra.mxu0 0.0
    %117 = vmatprep.subr.mxu0 0.0
    %118 = vmatpush1.msra.mxu0 0.0
    %119 = vmatprep.subr.mxu0 0.0
    %120 = vmatpush1.msra.mxu0 0.0
    %121 = vmatprep.subr.mxu0 0.0
    %122 = vmatpush1.msra.mxu0 0.0
    %123 = vmatprep.subr.mxu0 0.0
    %124 = vmatpush1.msra.mxu0 0.0
    %125 = vmatprep.subr.mxu0 0.0
    %126 = vmatpush1.msra.mxu0 0.0
    %127 = vmatprep.subr.mxu0 0.0
    %128 = vmatpush1.msra.mxu0 0.0
    %129 = vmatprep.subr.mxu0 0.0
    %130 = vmatpush1.msra.mxu0 0.0
    %131 = vmatprep.subr.mxu0 0.0
    %132 = vmatpush1.msra.mxu0 0.0
    %133 = vmatprep.subr.mxu0 0.0
    %134 = vmatpush1.msra.mxu0 0.0
    %135 = vmatprep.subr.mxu0 0.0
    %136 = vmatpush1.msra.mxu0 0.0
    %137 = vmatprep.subr.mxu0 0.0
    %138 = vmatpush1.msra.mxu0 0.0
    %139 = vmatprep.subr.mxu0 0.0
    %140 = vmatpush1.msra.mxu0 0.0
    %141 = vmatprep.subr.mxu0 0.0
    %142 = vmatpush1.msra.mxu0 0.0
    %143 = vmatprep.mubr.f32.mxu0 0.0
    %144 = vmatmul.mubr.f32.gmra.mrb[0].mxu0 %v68
    %v145 = vpop.f32.mrb[0].mxu0
    %v146 = vadd.f32 0.0, %v145
    %v147 = vpop.f32.mrb[0].mxu0
    %148 = vmatprep.mubr.f32.mxu0 0.0
    %149 = vmatmul.mubr.f32.gmra.mrb[0].mxu0 %v71
    %v150 = vpop.f32.mrb[0].mxu0
    %v151 = vadd.f32 0.0, %v150
    %v152 = vpop.f32.mrb[0].mxu0
    %153 = vmatprep.mubr.f32.mxu0 0.0
    %154 = vmatmul.mubr.f32.gmra.mrb[0].mxu0 %v74
    %v155 = vpop.f32.mrb[0].mxu0
    %v156 = vadd.f32 0.0, %v155
    %v157 = vpop.f32.mrb[0].mxu0
    %158 = vmatprep.mubr.f32.mxu0 0.0
    %159 = vmatmul.mubr.f32.gmra.mrb[0].mxu0 %v77
    %v160 = vpop.f32.mrb[0].mxu0
    %v161 = vadd.f32 0.0, %v160
    %v162 = vpop.f32.mrb[0].mxu0
    %163 = vdwg.mxu0
    %v164 = vadd.f32 %v50, %v146
    %v165 = vadd.f32 %v51, %v151
    %v166 = vadd.f32 %v52, %v156
    %v167 = vadd.f32 %v53, %v161
    %v168 = vmul.f32 %v35, 0.5
    %v169 = vmul.f32 %v36, 0.5
    %v170 = vmul.f32 %v37, 0.5
    %v171 = vmul.f32 %v38, 0.5
    %v173 = vsel %vm66, %v168, 0
    %v176 = vsel %vm66, %v169, 0
    %v179 = vsel %vm66, %v170, 0
    %v182 = vsel %vm66, %v171, 0
    %184 = vmatprep.subr.mxu0 0.0
    %185 = vmatpush1.msra.mxu0 %v164
    %186 = vmatprep.subr.mxu0 0.0
    %187 = vmatpush1.msra.mxu0 %v165
    %188 = vmatprep.subr.mxu0 0.0
    %189 = vmatpush1.msra.mxu0 %v166
    %190 = vmatprep.subr.mxu0 0.0
    %191 = vmatpush1.msra.mxu0 %v167
    %192 = vmatprep.subr.mxu0 0.0
    %193 = vmatpush1.msra.mxu0 0.0
    %194 = vmatprep.subr.mxu0 0.0
    %195 = vmatpush1.msra.mxu0 0.0
    %196 = vmatprep.subr.mxu0 0.0
    %197 = vmatpush1.msra.mxu0 0.0
    %198 = vmatprep.subr.mxu0 0.0
    %199 = vmatpush1.msra.mxu0 0.0
    %200 = vmatprep.subr.mxu0 0.0
    %201 = vmatpush1.msra.mxu0 0.0
    %202 = vmatprep.subr.mxu0 0.0
    %203 = vmatpush1.msra.mxu0 0.0
    %204 = vmatprep.subr.mxu0 0.0
    %205 = vmatpush1.msra.mxu0 0.0
    %206 = vmatprep.subr.mxu0 0.0
    %207 = vmatpush1.msra.mxu0 0.0
    %208 = vmatprep.subr.mxu0 0.0
    %209 = vmatpush1.msra.mxu0 0.0
    %210 = vmatprep.subr.mxu0 0.0
    %211 = vmatpush1.msra.mxu0 0.0
    %212 = vmatprep.subr.mxu0 0.0
    %213 = vmatpush1.msra.mxu0 0.0
    %214 = vmatprep.subr.mxu0 0.0
    %215 = vmatpush1.msra.mxu0 0.0
    %216 = vmatprep.subr.mxu0 0.0
    %217 = vmatpush1.msra.mxu0 0.0
    %218 = vmatprep.subr.mxu0 0.0
    %219 = vmatpush1.msra.mxu0 0.0
    %220 = vmatprep.subr.mxu0 0.0
    %221 = vmatpush1.msra.mxu0 0.0
    %222 = vmatprep.subr.mxu0 0.0
    %223 = vmatpush1.msra.mxu0 0.0
    %224 = vmatprep.subr.mxu0 0.0
    %225 = vmatpush1.msra.mxu0 0.0
    %226 = vmatprep.subr.mxu0 0.0
    %227 = vmatpush1.msra.mxu0 0.0
    %228 = vmatprep.subr.mxu0 0.0
    %229 = vmatpush1.msra.mxu0 0.0
    %230 = vmatprep.subr.mxu0 0.0
    %231 = vmatpush1.msra.mxu0 0.0
    %232 = vmatprep.subr.mxu0 0.0
    %233 = vmatpush1.msra.mxu0 0.0
    %234 = vmatprep.subr.mxu0 0.0
    %235 = vmatpush1.msra.mxu0 0.0
    %236 = vmatprep.subr.mxu0 0.0
    %237 = vmatpush1.msra.mxu0 0.0
    %238 = vmatprep.subr.mxu0 0.0
    %239 = vmatpush1.msra.mxu0 0.0
    %240 = vmatprep.subr.mxu0 0.0
    %241 = vmatpush1.msra.mxu0 0.0
    %242 = vmatprep.subr.mxu0 0.0
    %243 = vmatpush1.msra.mxu0 0.0
    %244 = vmatprep.subr.mxu0 0.0
    %245 = vmatpush1.msra.mxu0 0.0
    %246 = vmatprep.subr.mxu0 0.0
    %247 = vmatpush1.msra.mxu0 0.0
    %248 = vmatprep.mubr.f32.mxu0 0.0
    %249 = vmatmul.mubr.f32.gmra.mrb[0].mxu0 %v173
    %v250 = vpop.f32.mrb[0].mxu0
    %v251 = vadd.f32 0.0, %v250
    %v252 = vpop.f32.mrb[0].mxu0
    %253 = vmatprep.mubr.f32.mxu0 0.0
    %254 = vmatmul.mubr.f32.gmra.mrb[0].mxu0 %v176
    %v255 = vpop.f32.mrb[0].mxu0
    %v256 = vadd.f32 0.0, %v255
    %v257 = vpop.f32.mrb[0].mxu0
    %258 = vmatprep.mubr.f32.mxu0 0.0
    %259 = vmatmul.mubr.f32.gmra.mrb[0].mxu0 %v179
    %v260 = vpop.f32.mrb[0].mxu0
    %v261 = vadd.f32 0.0, %v260
    %v262 = vpop.f32.mrb[0].mxu0
    %263 = vmatprep.mubr.f32.mxu0 0.0
    %264 = vmatmul.mubr.f32.gmra.mrb[0].mxu0 %v182
    %v265 = vpop.f32.mrb[0].mxu0
    %v266 = vadd.f32 0.0, %v265
    %v267 = vpop.f32.mrb[0].mxu0
    %268 = vdwg.mxu0
    %v269 = vadd.f32 %v50, %v251
    %v270 = vadd.f32 %v51, %v256
    %v271 = vadd.f32 %v52, %v261
    %v272 = vadd.f32 %v53, %v266
    %v274 = vsel %vm66, %v35, 0
    %v277 = vsel %vm66, %v36, 0
    %v280 = vsel %vm66, %v37, 0
    %v283 = vsel %vm66, %v38, 0
    %285 = vmatprep.subr.mxu0 0.0
    %286 = vmatpush1.msra.mxu0 %v269
    %287 = vmatprep.subr.mxu0 0.0
    %288 = vmatpush1.msra.mxu0 %v270
    %289 = vmatprep.subr.mxu0 0.0
    %290 = vmatpush1.msra.mxu0 %v271
    %291 = vmatprep.subr.mxu0 0.0
    %292 = vmatpush1.msra.mxu0 %v272
    %293 = vmatprep.subr.mxu0 0.0
    %294 = vmatpush1.msra.mxu0 0.0
    %295 = vmatprep.subr.mxu0 0.0
    %296 = vmatpush1.msra.mxu0 0.0
    %297 = vmatprep.subr.mxu0 0.0
    %298 = vmatpush1.msra.mxu0 0.0
    %299 = vmatprep.subr.mxu0 0.0
    %300 = vmatpush1.msra.mxu0 0.0
    %301 = vmatprep.subr.mxu0 0.0
    %302 = vmatpush1.msra.mxu0 0.0
    %303 = vmatprep.subr.mxu0 0.0
    %304 = vmatpush1.msra.mxu0 0.0
    %305 = vmatprep.subr.mxu0 0.0
    %306 = vmatpush1.msra.mxu0 0.0
    %307 = vmatprep.subr.mxu0 0.0
    %308 = vmatpush1.msra.mxu0 0.0
    %309 = vmatprep.subr.mxu0 0.0
    %310 = vmatpush1.msra.mxu0 0.0
    %311 = vmatprep.subr.mxu0 0.0
    %312 = vmatpush1.msra.mxu0 0.0
    %313 = vmatprep.subr.mxu0 0.0
    %314 = vmatpush1.msra.mxu0 0.0
    %315 = vmatprep.subr.mxu0 0.0
    %316 = vmatpush1.msra.mxu0 0.0
    %317 = vmatprep.subr.mxu0 0.0
    %318 = vmatpush1.msra.mxu0 0.0
    %319 = vmatprep.subr.mxu0 0.0
    %320 = vmatpush1.msra.mxu0 0.0
    %321 = vmatprep.subr.mxu0 0.0
    %322 = vmatpush1.msra.mxu0 0.0
    %323 = vmatprep.subr.mxu0 0.0
    %324 = vmatpush1.msra.mxu0 0.0
    %325 = vmatprep.subr.mxu0 0.0
    %326 = vmatpush1.msra.mxu0 0.0
    %327 = vmatprep.subr.mxu0 0.0
    %328 = vmatpush1.msra.mxu0 0.0
    %329 = vmatprep.subr.mxu0 0.0
    %330 = vmatpush1.msra.mxu0 0.0
    %331 = vmatprep.subr.mxu0 0.0
    %332 = vmatpush1.msra.mxu0 0.0
    %333 = vmatprep.subr.mxu0 0.0
    %334 = vmatpush1.msra.mxu0 0.0
    %335 = vmatprep.subr.mxu0 0.0
    %336 = vmatpush1.msra.mxu0 0.0
    %337 = vmatprep.subr.mxu0 0.0
    %338 = vmatpush1.msra.mxu0 0.0
    %339 = vmatprep.subr.mxu0 0.0
    %340 = vmatpush1.msra.mxu0 0.0
    %341 = vmatprep.subr.mxu0 0.0
    %342 = vmatpush1.msra.mxu0 0.0
    %343 = vmatprep.subr.mxu0 0.0
    %344 = vmatpush1.msra.mxu0 0.0
    %345 = vmatprep.subr.mxu0 0.0
    %346 = vmatpush1.msra.mxu0 0.0
    %347 = vmatprep.subr.mxu0 0.0
    %348 = vmatpush1.msra.mxu0 0.0
    %349 = vmatprep.mubr.f32.mxu0 0.0
    %350 = vmatmul.mubr.f32.gmra.mrb[0].mxu0 %v274
    %v351 = vpop.f32.mrb[0].mxu0
    %v352 = vadd.f32 0.0, %v351
    %v353 = vpop.f32.mrb[0].mxu0
    %354 = vmatprep.mubr.f32.mxu0 0.0
    %355 = vmatmul.mubr.f32.gmra.mrb[0].mxu0 %v277
    %v356 = vpop.f32.mrb[0].mxu0
    %v357 = vadd.f32 0.0, %v356
    %v358 = vpop.f32.mrb[0].mxu0
    %359 = vmatprep.mubr.f32.mxu0 0.0
    %360 = vmatmul.mubr.f32.gmra.mrb[0].mxu0 %v280
    %v361 = vpop.f32.mrb[0].mxu0
    %v362 = vadd.f32 0.0, %v361
    %v363 = vpop.f32.mrb[0].mxu0
    %364 = vmatprep.mubr.f32.mxu0 0.0
    %365 = vmatmul.mubr.f32.gmra.mrb[0].mxu0 %v283
    %v366 = vpop.f32.mrb[0].mxu0
    %v367 = vadd.f32 0.0, %v366
    %v368 = vpop.f32.mrb[0].mxu0
    %369 = vdwg.mxu0
    %v370 = vadd.f32 %v50, %v352
    %v371 = vadd.f32 %v51, %v357
    %v372 = vadd.f32 %v52, %v362
    %v373 = vadd.f32 %v53, %v367
    %v375 = vsel %vm66, %v370, 0
    %v378 = vsel %vm66, %v371, 0
    %v381 = vsel %vm66, %v372, 0
    %v384 = vsel %vm66, %v373, 0
    %386 = vmatprep.subr.mxu0 0.0
    %387 = vmatpush1.msra.mxu0 %v370
    %388 = vmatprep.subr.mxu0 0.0
    %389 = vmatpush1.msra.mxu0 %v371
    %390 = vmatprep.subr.mxu0 0.0
    %391 = vmatpush1.msra.mxu0 %v372
    %392 = vmatprep.subr.mxu0 0.0
    %393 = vmatpush1.msra.mxu0 %v373
    %394 = vmatprep.subr.mxu0 0.0
    %395 = vmatpush1.msra.mxu0 0.0
    %396 = vmatprep.subr.mxu0 0.0
    %397 = vmatpush1.msra.mxu0 0.0
    %398 = vmatprep.subr.mxu0 0.0
    %399 = vmatpush1.msra.mxu0 0.0
    %400 = vmatprep.subr.mxu0 0.0
    %401 = vmatpush1.msra.mxu0 0.0
    %402 = vmatprep.subr.mxu0 0.0
    %403 = vmatpush1.msra.mxu0 0.0
    %404 = vmatprep.subr.mxu0 0.0
    %405 = vmatpush1.msra.mxu0 0.0
    %406 = vmatprep.subr.mxu0 0.0
    %407 = vmatpush1.msra.mxu0 0.0
    %408 = vmatprep.subr.mxu0 0.0
    %409 = vmatpush1.msra.mxu0 0.0
    %410 = vmatprep.subr.mxu0 0.0
    %411 = vmatpush1.msra.mxu0 0.0
    %412 = vmatprep.subr.mxu0 0.0
    %413 = vmatpush1.msra.mxu0 0.0
    %414 = vmatprep.subr.mxu0 0.0
    %415 = vmatpush1.msra.mxu0 0.0
    %416 = vmatprep.subr.mxu0 0.0
    %417 = vmatpush1.msra.mxu0 0.0
    %418 = vmatprep.subr.mxu0 0.0
    %419 = vmatpush1.msra.mxu0 0.0
    %420 = vmatprep.subr.mxu0 0.0
    %421 = vmatpush1.msra.mxu0 0.0
    %422 = vmatprep.subr.mxu0 0.0
    %423 = vmatpush1.msra.mxu0 0.0
    %424 = vmatprep.subr.mxu0 0.0
    %425 = vmatpush1.msra.mxu0 0.0
    %426 = vmatprep.subr.mxu0 0.0
    %427 = vmatpush1.msra.mxu0 0.0
    %428 = vmatprep.subr.mxu0 0.0
    %429 = vmatpush1.msra.mxu0 0.0
    %430 = vmatprep.subr.mxu0 0.0
    %431 = vmatpush1.msra.mxu0 0.0
    %432 = vmatprep.subr.mxu0 0.0
    %433 = vmatpush1.msra.mxu0 0.0
    %434 = vmatprep.subr.mxu0 0.0
    %435 = vmatpush1.msra.mxu0 0.0
    %436 = vmatprep.subr.mxu0 0.0
    %437 = vmatpush1.msra.mxu0 0.0
    %438 = vmatprep.subr.mxu0 0.0
    %439 = vmatpush1.msra.mxu0 0.0
    %440 = vmatprep.subr.mxu0 0.0
    %441 = vmatpush1.msra.mxu0 0.0
    %442 = vmatprep.subr.mxu0 0.0
    %443 = vmatpush1.msra.mxu0 0.0
    %444 = vmatprep.subr.mxu0 0.0
    %445 = vmatpush1.msra.mxu0 0.0
    %446 = vmatprep.subr.mxu0 0.0
    %447 = vmatpush1.msra.mxu0 0.0
    %448 = vmatprep.subr.mxu0 0.0
    %449 = vmatpush1.msra.mxu0 0.0
    %450 = vmatprep.mubr.f32.mxu0 0.0
    %451 = vmatmul.mubr.f32.gmra.mrb[0].mxu0 %v375
    %v452 = vpop.f32.mrb[0].mxu0
    %v453 = vadd.f32 0.0, %v452
    %v454 = vpop.f32.mrb[0].mxu0
    %455 = vmatprep.mubr.f32.mxu0 0.0
    %456 = vmatmul.mubr.f32.gmra.mrb[0].mxu0 %v378
    %v457 = vpop.f32.mrb[0].mxu0
    %v458 = vadd.f32 0.0, %v457
    %v459 = vpop.f32.mrb[0].mxu0
    %460 = vmatprep.mubr.f32.mxu0 0.0
    %461 = vmatmul.mubr.f32.gmra.mrb[0].mxu0 %v381
    %v462 = vpop.f32.mrb[0].mxu0
    %v463 = vadd.f32 0.0, %v462
    %v464 = vpop.f32.mrb[0].mxu0
    %465 = vmatprep.mubr.f32.mxu0 0.0
    %466 = vmatmul.mubr.f32.gmra.mrb[0].mxu0 %v384
    %v467 = vpop.f32.mrb[0].mxu0
    %v468 = vadd.f32 0.0, %v467
    %v469 = vpop.f32.mrb[0].mxu0
    %470 = vdwg.mxu0
    %475 = vrot.lane.b32.xlu0 %v453, 32
    %v476 = vpop.permute.xlu0 %475
    %477 = vrot.lane.b32.xlu0 %v458, 32
    %v478 = vpop.permute.xlu0 %477
    %479 = vrot.lane.b32.xlu0 %v463, 32
    %v480 = vpop.permute.xlu0 %479
    %481 = vrot.lane.b32.xlu0 %v468, 32
    %v482 = vpop.permute.xlu0 %481
    %v487 = vsel %vm66, %v370, %v476
    %v488 = vsel %vm66, %v371, %v478
    %v489 = vsel %vm66, %v372, %v480
    %v490 = vsel %vm66, %v373, %v482
    %495 = vrot.lane.b32.xlu0 %v487, 96
    %v496 = vpop.permute.xlu0 %495
    %497 = vrot.lane.b32.xlu0 %v488, 96
    %v498 = vpop.permute.xlu0 %497
    %499 = vrot.lane.b32.xlu0 %v489, 96
    %v500 = vpop.permute.xlu0 %499
    %501 = vrot.lane.b32.xlu0 %v490, 96
    %v502 = vpop.permute.xlu0 %501
    %v503 = vsel %vm66, %v496, 0
    %v505 = vsel %vm66, %v498, 0
    %v507 = vsel %vm66, %v500, 0
    %v509 = vsel %vm66, %v502, 0
    %511 = vmatprep.subr.mxu0 0.0
    %512 = vmatpush1.msra.mxu0 %v487
    %513 = vmatprep.subr.mxu0 0.0
    %514 = vmatpush1.msra.mxu0 %v488
    %515 = vmatprep.subr.mxu0 0.0
    %516 = vmatpush1.msra.mxu0 %v489
    %517 = vmatprep.subr.mxu0 0.0
    %518 = vmatpush1.msra.mxu0 %v490
    %519 = vmatprep.subr.mxu0 0.0
    %520 = vmatpush1.msra.mxu0 0.0
    %521 = vmatprep.subr.mxu0 0.0
    %522 = vmatpush1.msra.mxu0 0.0
    %523 = vmatprep.subr.mxu0 0.0
    %524 = vmatpush1.msra.mxu0 0.0
    %525 = vmatprep.subr.mxu0 0.0
    %526 = vmatpush1.msra.mxu0 0.0
    %527 = vmatprep.subr.mxu0 0.0
    %528 = vmatpush1.msra.mxu0 0.0
    %529 = vmatprep.subr.mxu0 0.0
    %530 = vmatpush1.msra.mxu0 0.0
    %531 = vmatprep.subr.mxu0 0.0
    %532 = vmatpush1.msra.mxu0 0.0
    %533 = vmatprep.subr.mxu0 0.0
    %534 = vmatpush1.msra.mxu0 0.0
    %535 = vmatprep.subr.mxu0 0.0
    %536 = vmatpush1.msra.mxu0 0.0
    %537 = vmatprep.subr.mxu0 0.0
    %538 = vmatpush1.msra.mxu0 0.0
    %539 = vmatprep.subr.mxu0 0.0
    %540 = vmatpush1.msra.mxu0 0.0
    %541 = vmatprep.subr.mxu0 0.0
    %542 = vmatpush1.msra.mxu0 0.0
    %543 = vmatprep.subr.mxu0 0.0
    %544 = vmatpush1.msra.mxu0 0.0
    %545 = vmatprep.subr.mxu0 0.0
    %546 = vmatpush1.msra.mxu0 0.0
    %547 = vmatprep.subr.mxu0 0.0
    %548 = vmatpush1.msra.mxu0 0.0
    %549 = vmatprep.subr.mxu0 0.0
    %550 = vmatpush1.msra.mxu0 0.0
    %551 = vmatprep.subr.mxu0 0.0
    %552 = vmatpush1.msra.mxu0 0.0
    %553 = vmatprep.subr.mxu0 0.0
    %554 = vmatpush1.msra.mxu0 0.0
    %555 = vmatprep.subr.mxu0 0.0
    %556 = vmatpush1.msra.mxu0 0.0
    %557 = vmatprep.subr.mxu0 0.0
    %558 = vmatpush1.msra.mxu0 0.0
    %559 = vmatprep.subr.mxu0 0.0
    %560 = vmatpush1.msra.mxu0 0.0
    %561 = vmatprep.subr.mxu0 0.0
    %562 = vmatpush1.msra.mxu0 0.0
    %563 = vmatprep.subr.mxu0 0.0
    %564 = vmatpush1.msra.mxu0 0.0
    %565 = vmatprep.subr.mxu0 0.0
    %566 = vmatpush1.msra.mxu0 0.0
    %567 = vmatprep.subr.mxu0 0.0
    %568 = vmatpush1.msra.mxu0 0.0
    %569 = vmatprep.subr.mxu0 0.0
    %570 = vmatpush1.msra.mxu0 0.0
    %571 = vmatprep.subr.mxu0 0.0
    %572 = vmatpush1.msra.mxu0 0.0
    %573 = vmatprep.subr.mxu0 0.0
    %574 = vmatpush1.msra.mxu0 0.0
    %575 = vmatprep.mubr.f32.mxu0 0.0
    %576 = vmatmul.mubr.f32.gmra.mrb[0].mxu0 %v503
    %v577 = vpop.f32.mrb[0].mxu0
    %v578 = vadd.f32 0.0, %v577
    %v579 = vpop.f32.mrb[0].mxu0
    %580 = vmatprep.mubr.f32.mxu0 0.0
    %581 = vmatmul.mubr.f32.gmra.mrb[0].mxu0 %v505
    %v582 = vpop.f32.mrb[0].mxu0
    %v583 = vadd.f32 0.0, %v582
    %v584 = vpop.f32.mrb[0].mxu0
    %585 = vmatprep.mubr.f32.mxu0 0.0
    %586 = vmatmul.mubr.f32.gmra.mrb[0].mxu0 %v507
    %v587 = vpop.f32.mrb[0].mxu0
    %v588 = vadd.f32 0.0, %v587
    %v589 = vpop.f32.mrb[0].mxu0
    %590 = vmatprep.mubr.f32.mxu0 0.0
    %591 = vmatmul.mubr.f32.gmra.mrb[0].mxu0 %v509
    %v592 = vpop.f32.mrb[0].mxu0
    %v593 = vadd.f32 0.0, %v592
    %v594 = vpop.f32.mrb[0].mxu0
    %595 = vdwg.mxu0
    %600 = vrot.lane.b32.xlu0 %v578, 64
    %v601 = vpop.permute.xlu0 %600
    %602 = vrot.lane.b32.xlu0 %v583, 64
    %v603 = vpop.permute.xlu0 %602
    %604 = vrot.lane.b32.xlu0 %v588, 64
    %v605 = vpop.permute.xlu0 %604
    %606 = vrot.lane.b32.xlu0 %v593, 64
    %v607 = vpop.permute.xlu0 %606
    %vm612 = vcmask 523264
    %v613 = vsel %vm612, %v487, %v601
    %v614 = vsel %vm612, %v488, %v603
    %v615 = vsel %vm612, %v489, %v605
    %v616 = vsel %vm612, %v490, %v607
    %621 = vrot.lane.b32.xlu0 %v613, 32
    %v622 = vpop.permute.xlu0 %621
    %623 = vrot.lane.b32.xlu0 %v614, 32
    %v624 = vpop.permute.xlu0 %623
    %625 = vrot.lane.b32.xlu0 %v615, 32
    %v626 = vpop.permute.xlu0 %625
    %627 = vrot.lane.b32.xlu0 %v616, 32
    %v628 = vpop.permute.xlu0 %627
    %v629 = vsel %vm66, %v622, 0
    %v631 = vsel %vm66, %v624, 0
    %v633 = vsel %vm66, %v626, 0
    %v635 = vsel %vm66, %v628, 0
    %637 = vmatprep.subr.mxu0 0.0
    %638 = vmatpush1.msra.mxu0 %v613
    %639 = vmatprep.subr.mxu0 0.0
    %640 = vmatpush1.msra.mxu0 %v614
    %641 = vmatprep.subr.mxu0 0.0
    %642 = vmatpush1.msra.mxu0 %v615
    %643 = vmatprep.subr.mxu0 0.0
    %644 = vmatpush1.msra.mxu0 %v616
    %645 = vmatprep.subr.mxu0 0.0
    %646 = vmatpush1.msra.mxu0 0.0
    %647 = vmatprep.subr.mxu0 0.0
    %648 = vmatpush1.msra.mxu0 0.0
    %649 = vmatprep.subr.mxu0 0.0
    %650 = vmatpush1.msra.mxu0 0.0
    %651 = vmatprep.subr.mxu0 0.0
    %652 = vmatpush1.msra.mxu0 0.0
    %653 = vmatprep.subr.mxu0 0.0
    %654 = vmatpush1.msra.mxu0 0.0
    %655 = vmatprep.subr.mxu0 0.0
    %656 = vmatpush1.msra.mxu0 0.0
    %657 = vmatprep.subr.mxu0 0.0
    %658 = vmatpush1.msra.mxu0 0.0
    %659 = vmatprep.subr.mxu0 0.0
    %660 = vmatpush1.msra.mxu0 0.0
    %661 = vmatprep.subr.mxu0 0.0
    %662 = vmatpush1.msra.mxu0 0.0
    %663 = vmatprep.subr.mxu0 0.0
    %664 = vmatpush1.msra.mxu0 0.0
    %665 = vmatprep.subr.mxu0 0.0
    %666 = vmatpush1.msra.mxu0 0.0
    %667 = vmatprep.subr.mxu0 0.0
    %668 = vmatpush1.msra.mxu0 0.0
    %669 = vmatprep.subr.mxu0 0.0
    %670 = vmatpush1.msra.mxu0 0.0
    %671 = vmatprep.subr.mxu0 0.0
    %672 = vmatpush1.msra.mxu0 0.0
    %673 = vmatprep.subr.mxu0 0.0
    %674 = vmatpush1.msra.mxu0 0.0
    %675 = vmatprep.subr.mxu0 0.0
    %676 = vmatpush1.msra.mxu0 0.0
    %677 = vmatprep.subr.mxu0 0.0
    %678 = vmatpush1.msra.mxu0 0.0
    %679 = vmatprep.subr.mxu0 0.0
    %680 = vmatpush1.msra.mxu0 0.0
    %681 = vmatprep.subr.mxu0 0.0
    %682 = vmatpush1.msra.mxu0 0.0
    %683 = vmatprep.subr.mxu0 0.0
    %684 = vmatpush1.msra.mxu0 0.0
    %685 = vmatprep.subr.mxu0 0.0
    %686 = vmatpush1.msra.mxu0 0.0
    %687 = vmatprep.subr.mxu0 0.0
    %688 = vmatpush1.msra.mxu0 0.0
    %689 = vmatprep.subr.mxu0 0.0
    %690 = vmatpush1.msra.mxu0 0.0
    %691 = vmatprep.subr.mxu0 0.0
    %692 = vmatpush1.msra.mxu0 0.0
    %693 = vmatprep.subr.mxu0 0.0
    %694 = vmatpush1.msra.mxu0 0.0
    %695 = vmatprep.subr.mxu0 0.0
    %696 = vmatpush1.msra.mxu0 0.0
    %697 = vmatprep.subr.mxu0 0.0
    %698 = vmatpush1.msra.mxu0 0.0
    %699 = vmatprep.subr.mxu0 0.0
    %700 = vmatpush1.msra.mxu0 0.0
    %701 = vmatprep.mubr.f32.mxu0 0.0
    %702 = vmatmul.mubr.f32.gmra.mrb[0].mxu0 %v629
    %v703 = vpop.f32.mrb[0].mxu0
    %v704 = vadd.f32 0.0, %v703
    %v705 = vpop.f32.mrb[0].mxu0
    %706 = vmatprep.mubr.f32.mxu0 0.0
    %707 = vmatmul.mubr.f32.gmra.mrb[0].mxu0 %v631
    %v708 = vpop.f32.mrb[0].mxu0
    %v709 = vadd.f32 0.0, %v708
    %v710 = vpop.f32.mrb[0].mxu0
    %711 = vmatprep.mubr.f32.mxu0 0.0
    %712 = vmatmul.mubr.f32.gmra.mrb[0].mxu0 %v633
    %v713 = vpop.f32.mrb[0].mxu0
    %v714 = vadd.f32 0.0, %v713
    %v715 = vpop.f32.mrb[0].mxu0
    %716 = vmatprep.mubr.f32.mxu0 0.0
    %717 = vmatmul.mubr.f32.gmra.mrb[0].mxu0 %v635
    %v718 = vpop.f32.mrb[0].mxu0
    %v719 = vadd.f32 0.0, %v718
    %v720 = vpop.f32.mrb[0].mxu0
    %721 = vdwg.mxu0
    %726 = vrot.lane.b32.xlu0 %v704, 32
    %v727 = vpop.permute.xlu0 %726
    %728 = vrot.lane.b32.xlu0 %v709, 32
    %v729 = vpop.permute.xlu0 %728
    %730 = vrot.lane.b32.xlu0 %v714, 32
    %v731 = vpop.permute.xlu0 %730
    %732 = vrot.lane.b32.xlu0 %v719, 32
    %v733 = vpop.permute.xlu0 %732
    %v734 = vsel %vm66, %v622, %v727
    %v735 = vsel %vm66, %v624, %v729
    %v736 = vsel %vm66, %v626, %v731
    %v737 = vsel %vm66, %v628, %v733
    %v750 = vsel %vm66, %v50, %v622
    %v751 = vsel %vm66, %v51, %v624
    %v752 = vsel %vm66, %v52, %v626
    %v753 = vsel %vm66, %v53, %v628
    %v754 = vld [vmem:[%s1] sm:$0x3]
    %v756 = vsel %vm66, %v754, 0
    %758 = vmatprep.subr.mxu0 %v734
    %759 = vmatpush1.msra.mxu0 %v750
    %760 = vmatprep.subr.mxu0 %v735
    %761 = vmatpush1.msra.mxu0 %v751
    %762 = vmatprep.subr.mxu0 %v736
    %763 = vmatpush1.msra.mxu0 %v752
    %764 = vmatprep.subr.mxu0 %v737
    %765 = vmatpush1.msra.mxu0 %v753
    %766 = vmatprep.subr.mxu0 0.0
    %767 = vmatpush1.msra.mxu0 0.0
    %768 = vmatprep.subr.mxu0 0.0
    %769 = vmatpush1.msra.mxu0 0.0
    %770 = vmatprep.subr.mxu0 0.0
    %771 = vmatpush1.msra.mxu0 0.0
    %772 = vmatprep.subr.mxu0 0.0
    %773 = vmatpush1.msra.mxu0 0.0
    %774 = vmatprep.subr.mxu0 0.0
    %775 = vmatpush1.msra.mxu0 0.0
    %776 = vmatprep.subr.mxu0 0.0
    %777 = vmatpush1.msra.mxu0 0.0
    %778 = vmatprep.subr.mxu0 0.0
    %779 = vmatpush1.msra.mxu0 0.0
    %780 = vmatprep.subr.mxu0 0.0
    %781 = vmatpush1.msra.mxu0 0.0
    %782 = vmatprep.subr.mxu0 0.0
    %783 = vmatpush1.msra.mxu0 0.0
    %784 = vmatprep.subr.mxu0 0.0
    %785 = vmatpush1.msra.mxu0 0.0
    %786 = vmatprep.subr.mxu0 0.0
    %787 = vmatpush1.msra.mxu0 0.0
    %788 = vmatprep.subr.mxu0 0.0
    %789 = vmatpush1.msra.mxu0 0.0
    %790 = vmatprep.subr.mxu0 0.0
    %791 = vmatpush1.msra.mxu0 0.0
    %792 = vmatprep.subr.mxu0 0.0
    %793 = vmatpush1.msra.mxu0 0.0
    %794 = vmatprep.subr.mxu0 0.0
    %795 = vmatpush1.msra.mxu0 0.0
    %796 = vmatprep.subr.mxu0 0.0
    %797 = vmatpush1.msra.mxu0 0.0
    %798 = vmatprep.subr.mxu0 0.0
    %799 = vmatpush1.msra.mxu0 0.0
    %800 = vmatprep.subr.mxu0 0.0
    %801 = vmatpush1.msra.mxu0 0.0
    %802 = vmatprep.subr.mxu0 0.0
    %803 = vmatpush1.msra.mxu0 0.0
    %804 = vmatprep.subr.mxu0 0.0
    %805 = vmatpush1.msra.mxu0 0.0
    %806 = vmatprep.subr.mxu0 0.0
    %807 = vmatpush1.msra.mxu0 0.0
    %808 = vmatprep.subr.mxu0 0.0
    %809 = vmatpush1.msra.mxu0 0.0
    %810 = vmatprep.subr.mxu0 0.0
    %811 = vmatpush1.msra.mxu0 0.0
    %812 = vmatprep.subr.mxu0 0.0
    %813 = vmatpush1.msra.mxu0 0.0
    %814 = vmatprep.subr.mxu0 0.0
    %815 = vmatpush1.msra.mxu0 0.0
    %816 = vmatprep.subr.mxu0 0.0
    %817 = vmatpush1.msra.mxu0 0.0
    %818 = vmatprep.subr.mxu0 0.0
    %819 = vmatpush1.msra.mxu0 0.0
    %820 = vmatprep.subr.mxu0 0.0
    %821 = vmatpush1.msra.mxu0 0.0
    %822 = vmatprep.mubr.f32.mxu0 0.0
    %823 = vmatmul.mubr.f32.gmra.mrb[0].mxu0 %v756
    %v824 = vpop.f32.mrb[0].mxu0
    %v825 = vadd.f32 0.0, %v824
    %v826 = vpop.f32.mrb[0].mxu0
    %v827 = vadd.f32 0.0, %v826
    %828 = vdwg.mxu0
    %829 = vmatprep.subr.mxu0 0.0
    %830 = vmatpush1.msra.mxu0 %v727
    %831 = vmatprep.subr.mxu0 0.0
    %832 = vmatpush1.msra.mxu0 %v729
    %833 = vmatprep.subr.mxu0 0.0
    %834 = vmatpush1.msra.mxu0 %v731
    %835 = vmatprep.subr.mxu0 0.0
    %836 = vmatpush1.msra.mxu0 %v733
    %837 = vmatprep.subr.mxu0 0.0
    %838 = vmatpush1.msra.mxu0 0.0
    %839 = vmatprep.subr.mxu0 0.0
    %840 = vmatpush1.msra.mxu0 0.0
    %841 = vmatprep.subr.mxu0 0.0
    %842 = vmatpush1.msra.mxu0 0.0
    %843 = vmatprep.subr.mxu0 0.0
    %844 = vmatpush1.msra.mxu0 0.0
    %845 = vmatprep.subr.mxu0 0.0
    %846 = vmatpush1.msra.mxu0 0.0
    %847 = vmatprep.subr.mxu0 0.0
    %848 = vmatpush1.msra.mxu0 0.0
    %849 = vmatprep.subr.mxu0 0.0
    %850 = vmatpush1.msra.mxu0 0.0
    %851 = vmatprep.subr.mxu0 0.0
    %852 = vmatpush1.msra.mxu0 0.0
    %853 = vmatprep.subr.mxu0 0.0
    %854 = vmatpush1.msra.mxu0 0.0
    %855 = vmatprep.subr.mxu0 0.0
    %856 = vmatpush1.msra.mxu0 0.0
    %857 = vmatprep.subr.mxu0 0.0
    %858 = vmatpush1.msra.mxu0 0.0
    %859 = vmatprep.subr.mxu0 0.0
    %860 = vmatpush1.msra.mxu0 0.0
    %861 = vmatprep.subr.mxu0 0.0
    %862 = vmatpush1.msra.mxu0 0.0
    %863 = vmatprep.subr.mxu0 0.0
    %864 = vmatpush1.msra.mxu0 0.0
    %865 = vmatprep.subr.mxu0 0.0
    %866 = vmatpush1.msra.mxu0 0.0
    %867 = vmatprep.subr.mxu0 0.0
    %868 = vmatpush1.msra.mxu0 0.0
    %869 = vmatprep.subr.mxu0 0.0
    %870 = vmatpush1.msra.mxu0 0.0
    %871 = vmatprep.subr.mxu0 0.0
    %872 = vmatpush1.msra.mxu0 0.0
    %873 = vmatprep.subr.mxu0 0.0
    %874 = vmatpush1.msra.mxu0 0.0
    %875 = vmatprep.subr.mxu0 0.0
    %876 = vmatpush1.msra.mxu0 0.0
    %877 = vmatprep.subr.mxu0 0.0
    %878 = vmatpush1.msra.mxu0 0.0
    %879 = vmatprep.subr.mxu0 0.0
    %880 = vmatpush1.msra.mxu0 0.0
    %881 = vmatprep.subr.mxu0 0.0
    %882 = vmatpush1.msra.mxu0 0.0
    %883 = vmatprep.subr.mxu0 0.0
    %884 = vmatpush1.msra.mxu0 0.0
    %885 = vmatprep.subr.mxu0 0.0
    %886 = vmatpush1.msra.mxu0 0.0
    %887 = vmatprep.subr.mxu0 0.0
    %888 = vmatpush1.msra.mxu0 0.0
    %889 = vmatprep.subr.mxu0 0.0
    %890 = vmatpush1.msra.mxu0 0.0
    %891 = vmatprep.subr.mxu0 0.0
    %892 = vmatpush1.msra.mxu0 0.0
    %893 = vmatprep.mubr.f32.mxu0 0.0
    %894 = vmatmul.mubr.f32.gmra.mrb[0].mxu0 %v756
    %v895 = vpop.f32.mrb[0].mxu0
    %v896 = vadd.f32 0.0, %v895
    %v897 = vpop.f32.mrb[0].mxu0
    %898 = vdwg.mxu0
    %v902 = vcombine.low %v825, %v827
    %v904 = vunpack.c.l.s4 1983009808
    %v905 = vunpack.c.0.s8 %v904
    %v906 = vlaneseq
    %v907 = vshrl.u32 %v906, 7
    %v908 = vsub.s32 %v905, %v907
    %v909 = vrot.slane %v902, %v908
    %v911 = vunpack.c.l.s4 1983009808
    %v912 = vunpack.c.0.s8 %v911
    %v913 = vlaneseq
    %v914 = vshrl.u32 %v913, 7
    %v915 = vsub.s32 %v912, %v914
    %v916 = vrot.slane %v896, %v915
    %v917 = vcombine.low %v909, %v916
    %vm919 = vcmask 1041408
    %vm920 = vcmask 1043458
    %vm921 = vmor %vm920, %vm919
    %vm922 = vcmask 259076
    %vm923 = vmor %vm922, %vm921
    %924 = vst.msk [vmem:[%s3] sm:$0x3f] %vm923, %v917
    // Predicated region
    $region18: #{multi_rinn_forward.1} parent=1 // pred_check
      _
    $region19: #{multi_rinn_forward.1} parent=1 // pred_check_branch
      %926 = sbr.rel (0) target = $region21
    $region20: #{multi_rinn_forward.1} parent=1 // pred_region
      _
    $region21: #{multi_rinn_forward.1} parent=1 // pred_fallthru
      _
    // Predicated region
    $region22: #{multi_rinn_forward.1} parent=1 // pred_check
      _
    $region23: #{multi_rinn_forward.1} parent=1 // pred_check_branch
      %928 = sbr.rel (0) target = $region25
    $region24: #{multi_rinn_forward.1} parent=1 // pred_region
      _
    $region25: #{multi_rinn_forward.1} parent=1 // pred_fallthru
      _
    %929 = vsyncpa [#allocation4], 1

</llo_original>
